<compile_context>
chip_gen: v5e
topology: v5e:2x2
jax: 0.10.0
libtpu: 0.0.40
codegen_flags: <defaults>
</compile_context>

<pallas_src>
import functools

import jax
import jax.numpy as jnp
from jax.experimental import pallas as pl
from jax.experimental.pallas import tpu as pltpu

HIDDEN = 512
LANE = 128
SUBLANE = 8
NEG_PAD = -1e9   # bias for padded action columns -> can never win an argmax


def _round_up(x, m):
    return ((x + m - 1) // m) * m


def dqn_kernel(x_ref, w1_ref, b1_ref, w2_ref, b2_ref, out_ref):
    # uint8 observations cast straight to bf16 (exact for 0..255). The 1/256
    # input scale of the PyTorch forward (x.float()/256) is already folded into
    # W1, so the kernel is: cast -> matmul -> bias -> ReLU -> matmul -> bias.
    x = x_ref[...].astype(jnp.bfloat16)
    h = jnp.dot(x, w1_ref[...], preferred_element_type=jnp.float32) + b1_ref[...]
    h = jnp.maximum(h, 0.0)
    out = jnp.dot(h.astype(jnp.bfloat16), w2_ref[...],
                  preferred_element_type=jnp.float32) + b2_ref[...]
    out_ref[...] = out.astype(out_ref.dtype)   # lane-dense bf16 store


def _choose_block_b(batch):
    """Adaptive batch tile:
       - small acting batches (<=128): one tight tile, no padding-row waste.
       - large batches: fat tiles (capped at 512) with >= 2 grid steps so the
         'parallel' axis actually shards across v7x's two TensorCores and the
         ~0.35us per-grid-step overhead is amortized."""
    b8 = _round_up(batch, SUBLANE)
    if b8 <= 128:
        return b8
    return min(512, _round_up(pl.cdiv(b8, 2), SUBLANE))


@functools.partial(jax.jit, static_argnames=("n_actions", "block_b"))
def dqn_forward(x, w1_scaled, b1, w2_padded, b2_padded, *, n_actions, block_b=None):
    """x: (B, D) uint8 raw observations. Returns (B, n_actions) float32 Q-values."""
    B, D = x.shape
    H = w1_scaled.shape[1]
    Ap = w2_padded.shape[1]            # lane-padded action width (multiple of 128)

    bb = block_b if block_b is not None else _choose_block_b(B)
    bb = _round_up(bb, SUBLANE)        # keep f32/bf16 sublane tiling legal
    n_tiles = pl.cdiv(B, bb)
    Bp = n_tiles * bb
    if Bp != B:                        # only materialize the pad when needed
        x = jnp.pad(x, ((0, Bp - B), (0, 0)))

    cost = pl.CostEstimate(
        flops=2 * Bp * (D * H + H * Ap),
        transcendentals=0,
        bytes_accessed=(Bp * D                        # uint8 input
                        + D * H * 2 + H * 4           # W1 bf16 + b1 f32
                        + H * Ap * 2 + Ap * 4         # W2 bf16 + b2 f32
                        + Bp * Ap * 2),               # bf16 output
    )

    out_padded = pl.pallas_call(
        dqn_kernel,
        out_shape=jax.ShapeDtypeStruct((Bp, Ap), jnp.bfloat16),
        grid=(n_tiles,),
        in_specs=[
            pl.BlockSpec((bb, D), lambda i: (i, 0)),    # batch-tiled input
            pl.BlockSpec((D, H), lambda i: (0, 0)),     # W1 resident
            pl.BlockSpec((1, H), lambda i: (0, 0)),     # b1 resident
            pl.BlockSpec((H, Ap), lambda i: (0, 0)),    # W2 resident
            pl.BlockSpec((1, Ap), lambda i: (0, 0)),    # b2 resident
        ],
        out_specs=pl.BlockSpec((bb, Ap), lambda i: (i, 0)),
        compiler_params=pltpu.CompilerParams(
            dimension_semantics=("parallel",),          # shard tiles on v7x TCs
        ),
        cost_estimate=cost,
    )(x, w1_scaled, b1, w2_padded, b2_padded)

    # Layout plumbing back to the logical module interface. A consumer that
    # tolerates the padded slab (e.g. epsilon-greedy argmax) should take
    # out_padded directly: pad columns carry NEG_PAD bias so they can't win.
    return out_padded[:B, :n_actions].astype(jnp.float32)


def init_params(key, in_features, hidden, n_actions):
    # Deterministic init mimicking PyTorch nn.Linear default:
    # U(-1/sqrt(fan_in), 1/sqrt(fan_in)) for weight and bias.
    # Weights stored pre-transposed as (in_features, out_features).
    k1, k2, k3, k4 = jax.random.split(key, 4)
    bound1 = 1.0 / jnp.sqrt(jnp.float32(in_features))
    bound2 = 1.0 / jnp.sqrt(jnp.float32(hidden))
    w1 = jax.random.uniform(k1, (in_features, hidden), jnp.float32, -bound1, bound1)
    b1 = jax.random.uniform(k2, (1, hidden), jnp.float32, -bound1, bound1)
    w2 = jax.random.uniform(k3, (hidden, n_actions), jnp.float32, -bound2, bound2)
    b2 = jax.random.uniform(k4, (1, n_actions), jnp.float32, -bound2, bound2)
    return w1, b1, w2, b2


def prepare_params(w1, b1, w2, b2):
    """One-time parameter prep: fold 1/256 into W1, cast matmul weights to
    bf16, zero-pad W2 to a lane-dense width (multiple of 128), and pad b2's
    dead columns with NEG_PAD so the padded output slab is argmax-safe."""
    H, A = w2.shape
    Ap = pl.cdiv(A, LANE) * LANE
    w1_scaled = (w1 * (1.0 / 256.0)).astype(jnp.bfloat16)
    b1_f32 = b1.astype(jnp.float32)
    w2_padded = jnp.zeros((H, Ap), jnp.bfloat16).at[:, :A].set(w2.astype(jnp.bfloat16))
    b2_padded = jnp.full((1, Ap), NEG_PAD, jnp.float32).at[:, :A].set(b2)
    return w1_scaled, b1_f32, w2_padded, b2_padded


if __name__ == "__main__":
    key = jax.random.PRNGKey(0)
    k_x, k_p = jax.random.split(key)

    B = 8          # batch
    D = 32         # input_shape[0]
    H = HIDDEN     # hidden (fixed by the module)
    A = 6          # n_actions

    # raw byte-valued observation (uint8); kernel-side weights carry the /256
    x = jax.random.randint(k_x, (B, D), 0, 256, dtype=jnp.int32).astype(jnp.uint8)
    w1, b1, w2, b2 = init_params(k_p, D, H, A)
    w1s, b1f, w2p, b2p = prepare_params(w1, b1, w2, b2)

    out = dqn_forward(x, w1s, b1f, w2p, b2p, n_actions=A)
    jax.block_until_ready(out)

    # reference check against the exact PyTorch-semantics f32 path
    fx = x.astype(jnp.float32) / 256.0
    ref = jnp.maximum(fx @ w1 + b1, 0.0) @ w2 + b2
    assert out.shape == (B, A)
    # bf16 matmul inputs + bf16 output store -> loosened tolerance
    # (accumulation is still f32)
    assert jnp.allclose(out, ref, atol=5e-2, rtol=5e-2), (
        "max abs diff", float(jnp.max(jnp.abs(out - ref))))

    print("KERNEL_OK")
</pallas_src>

<mosaic_0001>
module attributes {stable_mosaic.version = 11 : i64} {
  func.func @dqn_kernel(%arg0: i32, %arg1: memref<8x32xi8, #tpu.memory_space<vmem>>, %arg2: memref<32x512xbf16, #tpu.memory_space<vmem>>, %arg3: memref<1x512xf32, #tpu.memory_space<vmem>>, %arg4: memref<512x128xbf16, #tpu.memory_space<vmem>>, %arg5: memref<1x128xf32, #tpu.memory_space<vmem>>, %arg6: memref<8x128xbf16, #tpu.memory_space<vmem>>) attributes {dimension_semantics = [#tpu.dimension_semantics<parallel>], iteration_bounds = array<i64: 1>, scalar_prefetch = 0 : i64, scratch_operands = 0 : i64, tpu.core_type = #tpu.core_type<tc>, window_params = [{transform_indices = @transform_0, window_bounds = array<i64: 8, 32>}, {pipeline_mode = #tpu.pipeline_mode<synchronous>, transform_indices = @transform_1, window_bounds = array<i64: 32, 512>}, {pipeline_mode = #tpu.pipeline_mode<synchronous>, transform_indices = @transform_2, window_bounds = array<i64: 1, 512>}, {pipeline_mode = #tpu.pipeline_mode<synchronous>, transform_indices = @transform_3, window_bounds = array<i64: 512, 128>}, {pipeline_mode = #tpu.pipeline_mode<synchronous>, transform_indices = @transform_4, window_bounds = array<i64: 1, 128>}, {transform_indices = @transform_5, window_bounds = array<i64: 8, 128>}]} {
    %c0 = arith.constant 0 : index
    %c0_0 = arith.constant 0 : index
    %0 = vector.load %arg1[%c0, %c0_0] : memref<8x32xi8, #tpu.memory_space<vmem>>, vector<8x32xi8>
    %1 = arith.uitofp %0 : vector<8x32xi8> to vector<8x32xbf16>
    %c0_1 = arith.constant 0 : index
    %c0_2 = arith.constant 0 : index
    %2 = vector.load %arg2[%c0_1, %c0_2] : memref<32x512xbf16, #tpu.memory_space<vmem>>, vector<32x512xbf16>
    %cst = arith.constant dense<0.000000e+00> : vector<8x512xf32>
    %3 = tpu.matmul %1, %2, %cst {dimension_numbers = #tpu.dot_dimension_numbers<[1], [0], [0], [1], [0, 0, 1, 1], [], []>} : vector<8x32xbf16>, vector<32x512xbf16>, vector<8x512xf32> -> vector<8x512xf32>
    %c0_3 = arith.constant 0 : index
    %c0_4 = arith.constant 0 : index
    %4 = vector.load %arg3[%c0_3, %c0_4] : memref<1x512xf32, #tpu.memory_space<vmem>>, vector<1x512xf32>
    %5 = vector.broadcast %4 : vector<1x512xf32> to vector<8x512xf32>
    %6 = arith.addf %3, %5 : vector<8x512xf32>
    %cst_5 = arith.constant 0.000000e+00 : f32
    %7 = vector.broadcast %cst_5 : f32 to vector<8x512xf32>
    %8 = arith.maximumf %6, %7 : vector<8x512xf32>
    %9 = arith.truncf %8 : vector<8x512xf32> to vector<8x512xbf16>
    %c0_6 = arith.constant 0 : index
    %c0_7 = arith.constant 0 : index
    %10 = vector.load %arg4[%c0_6, %c0_7] : memref<512x128xbf16, #tpu.memory_space<vmem>>, vector<512x128xbf16>
    %cst_8 = arith.constant dense<0.000000e+00> : vector<8x128xf32>
    %11 = tpu.matmul %9, %10, %cst_8 {dimension_numbers = #tpu.dot_dimension_numbers<[1], [0], [0], [1], [0, 0, 1, 1], [], []>} : vector<8x512xbf16>, vector<512x128xbf16>, vector<8x128xf32> -> vector<8x128xf32>
    %c0_9 = arith.constant 0 : index
    %c0_10 = arith.constant 0 : index
    %12 = vector.load %arg5[%c0_9, %c0_10] : memref<1x128xf32, #tpu.memory_space<vmem>>, vector<1x128xf32>
    %13 = vector.broadcast %12 : vector<1x128xf32> to vector<8x128xf32>
    %14 = arith.addf %11, %13 : vector<8x128xf32>
    %15 = arith.truncf %14 : vector<8x128xf32> to vector<8x128xbf16>
    %c0_11 = arith.constant 0 : index
    %c0_12 = arith.constant 0 : index
    %16 = vector.load %arg6[%c0_11, %c0_12] : memref<8x128xbf16, #tpu.memory_space<vmem>>, vector<8x128xbf16>
    tpu.vector_store %arg6[%c0_11, %c0_12], %15 {strides = array<i32>} : memref<8x128xbf16, #tpu.memory_space<vmem>>, vector<8x128xbf16>,
    return
  }
  func.func @transform_0(%arg0: i32) -> (i32, i32) {
    %c0_i32 = arith.constant 0 : i32
    %c0_i32_0 = arith.constant 0 : i32
    return %arg0, %c0_i32 : i32, i32
  }
  func.func @transform_1(%arg0: i32) -> (i32, i32) {
    %c0_i32 = arith.constant 0 : i32
    %c0_i32_0 = arith.constant 0 : i32
    %c0_i32_1 = arith.constant 0 : i32
    return %c0_i32, %c0_i32_0 : i32, i32
  }
  func.func @transform_2(%arg0: i32) -> (i32, i32) {
    %c0_i32 = arith.constant 0 : i32
    %c0_i32_0 = arith.constant 0 : i32
    %c0_i32_1 = arith.constant 0 : i32
    return %c0_i32, %c0_i32_0 : i32, i32
  }
  func.func @transform_3(%arg0: i32) -> (i32, i32) {
    %c0_i32 = arith.constant 0 : i32
    %c0_i32_0 = arith.constant 0 : i32
    %c0_i32_1 = arith.constant 0 : i32
    return %c0_i32, %c0_i32_0 : i32, i32
  }
  func.func @transform_4(%arg0: i32) -> (i32, i32) {
    %c0_i32 = arith.constant 0 : i32
    %c0_i32_0 = arith.constant 0 : i32
    %c0_i32_1 = arith.constant 0 : i32
    return %c0_i32, %c0_i32_0 : i32, i32
  }
  func.func @transform_5(%arg0: i32) -> (i32, i32) {
    %c0_i32 = arith.constant 0 : i32
    %c0_i32_0 = arith.constant 0 : i32
    return %arg0, %c0_i32 : i32, i32
  }
}

</mosaic_0001>

<llo_original>
// kernel: dqn_forward.1
$region0: #{dqn_forward.1}
  #allocation0 [shape = 'u32[]', space=smem, size = 0x4, offset = 0x4, fixed_abs, tag = 'smem constant byte address 0x4 - core index']
  #allocation1 [shape = 'u32[72,128]{1,0:T(1,128)}', space=vmem, size = 0x9000, scoped, tag = 'internal scratch']
  %s0 = inlined_call_operand.hbm [shape: u8[8,32], index: 0, kind: input, shape index: {}]
  %s1 = inlined_call_operand.hbm [shape: bf16[32,512], index: 1, kind: input, shape index: {}]
  %s2 = inlined_call_operand.hbm [shape: f32[1,512], index: 2, kind: input, shape index: {}]
  %s3 = inlined_call_operand.hbm [shape: bf16[512,128], index: 3, kind: input, shape index: {}]
  %s4 = inlined_call_operand.vmem [shape: f32[1,128], index: 4, kind: input, shape index: {}]
  %s5 = inlined_call_operand.vmem [shape: bf16[8,128], index: 5, kind: output, shape index: {}]
  %s6 = sld [smem:[#allocation0]]
  $region46: #{dqn_forward.1} parent=0
    _
  %s8 = ssub.s32 1, %s6
  %s9 = scalar_select 0, %s8, %s6
  $region1: #{dqn_forward.1} parent=0
    #allocation2 [shape = 'u8[1024]{0}', space=vmem, size = 0x400, scoped, tag = 'input window, operand 0, single buffered']
    #allocation3 [shape = 's32[1]{0}', space=sflag, size = 0x4, scoped, tag = 'scoped memory for dqn_forward.1']
    #allocation4 [shape = 'u8[32768]{0}', space=vmem, size = 0x8000, scoped, tag = 'input window, operand 1, single buffered']
    #allocation5 [shape = 's32[1]{0}', space=sflag, size = 0x4, scoped, tag = 'scoped memory for dqn_forward.1']
    #allocation6 [shape = 'u8[2048]{0}', space=vmem, size = 0x800, scoped, tag = 'input window, operand 2, single buffered']
    #allocation7 [shape = 'u8[131072]{0}', space=vmem, size = 0x20000, scoped, tag = 'input window, operand 3, single buffered']
    #allocation8 [shape = 's32[1]{0}', space=sflag, size = 0x4, scoped, tag = 'scoped memory for dqn_forward.1']
    %10 = vsyncpa [#allocation3], 0
    %11 = vsyncpa [#allocation5], 0
    %12 = vsyncpa [#allocation8], 0
    // Predicated region
    $region2: #{dqn_forward.1} parent=1 // pred_check
      _
    $region3: #{dqn_forward.1} parent=1 // pred_check_branch
      %14 = sbr.rel (0) target = $region5
    $region4: #{dqn_forward.1} parent=1 // pred_region
      %16 = vsyncadd [#allocation3], 0
      %s18 = sshll.u32 %s0, 4
      %s19 = int_to_ptr.hbm [resolvable:$true] %s18
      %s20 = sshll.u32 [#allocation2], 4
      %s21 = int_to_ptr.vmem [resolvable:$true] %s20
      %23 = dma.hbm_to_vmem [thread:$0]  %s19, 32, %s21, [#allocation3]
    $region5: #{dqn_forward.1} parent=1 // pred_fallthru
      _
    // Predicated region
    $region6: #{dqn_forward.1} parent=1 // pred_check
      _
    $region7: #{dqn_forward.1} parent=1 // pred_check_branch
      %25 = sbr.rel (0) target = $region9
    $region8: #{dqn_forward.1} parent=1 // pred_region
      %27 = vsyncadd [#allocation5], 0
      %s28 = sshll.u32 %s1, 4
      %s29 = int_to_ptr.hbm [resolvable:$true] %s28
      %s30 = sshll.u32 [#allocation4], 4
      %s31 = int_to_ptr.vmem [resolvable:$true] %s30
      %36 = dma.hbm_to_vmem [thread:$0]  %s29, 1024, %s31, [#allocation5], 256, 256, 16
    $region9: #{dqn_forward.1} parent=1 // pred_fallthru
      _
    // Predicated region
    $region10: #{dqn_forward.1} parent=1 // pred_check
      _
    $region11: #{dqn_forward.1} parent=1 // pred_check_branch
      %38 = sbr.rel (0) target = $region13
    $region12: #{dqn_forward.1} parent=1 // pred_region
      %40 = vsyncadd [#allocation5], 0
      %s42 = sshll.u32 %s2, 4
      %s43 = int_to_ptr.hbm [resolvable:$true] %s42
      %s44 = sshll.u32 [#allocation6], 4
      %s45 = int_to_ptr.vmem [resolvable:$true] %s44
      %47 = dma.hbm_to_vmem [thread:$0]  %s43, 64, %s45, [#allocation5]
    $region13: #{dqn_forward.1} parent=1 // pred_fallthru
      _
    // Predicated region
    $region14: #{dqn_forward.1} parent=1 // pred_check
      _
    $region15: #{dqn_forward.1} parent=1 // pred_check_branch
      %49 = sbr.rel (0) target = $region17
    $region16: #{dqn_forward.1} parent=1 // pred_region
      %51 = vsyncadd [#allocation8], 0
      %s52 = sshll.u32 %s3, 4
      %s53 = int_to_ptr.hbm [resolvable:$true] %s52
      %s54 = sshll.u32 [#allocation7], 4
      %s55 = int_to_ptr.vmem [resolvable:$true] %s54
      %60 = dma.hbm_to_vmem [thread:$0]  %s53, 4096, %s55, [#allocation8], 64, 64, 4
    $region17: #{dqn_forward.1} parent=1 // pred_fallthru
      _
    // Predicated region
    $region18: #{dqn_forward.1} parent=1 // pred_check
      _
    $region19: #{dqn_forward.1} parent=1 // pred_check_branch
      %62 = sbr.rel (0) target = $region21
    $region20: #{dqn_forward.1} parent=1 // pred_region
      _
    $region21: #{dqn_forward.1} parent=1 // pred_fallthru
      _
    // Predicated region
    $region22: #{dqn_forward.1} parent=1 // pred_check
      _
    $region23: #{dqn_forward.1} parent=1 // pred_check_branch
      %64 = sbr.rel (0) target = $region25
    $region24: #{dqn_forward.1} parent=1 // pred_region
      %66 = dma.done [#allocation3], 32
    $region25: #{dqn_forward.1} parent=1 // pred_fallthru
      _
    // Predicated region
    $region26: #{dqn_forward.1} parent=1 // pred_check
      _
    $region27: #{dqn_forward.1} parent=1 // pred_check_branch
      %68 = sbr.rel (0) target = $region29
    $region28: #{dqn_forward.1} parent=1 // pred_region
      %70 = dma.done [#allocation5], 1024
    $region29: #{dqn_forward.1} parent=1 // pred_fallthru
      _
    // Predicated region
    $region30: #{dqn_forward.1} parent=1 // pred_check
      _
    $region31: #{dqn_forward.1} parent=1 // pred_check_branch
      %72 = sbr.rel (0) target = $region33
    $region32: #{dqn_forward.1} parent=1 // pred_region
      %74 = dma.done [#allocation5], 64
    $region33: #{dqn_forward.1} parent=1 // pred_fallthru
      _
    // Predicated region
    $region34: #{dqn_forward.1} parent=1 // pred_check
      _
    $region35: #{dqn_forward.1} parent=1 // pred_check_branch
      %76 = sbr.rel (0) target = $region37
    $region36: #{dqn_forward.1} parent=1 // pred_region
      %78 = dma.done [#allocation8], 4096
    $region37: #{dqn_forward.1} parent=1 // pred_fallthru
      _
    %v80 = vld [vmem:[#allocation2] sm:$0x3]
    %v81 = vunpack.c.0.s8 %v80
    %v82 = vand.u32 %v81, 255
    %v83 = vcvt.s32.f32 %v82
    %v84 = vpack.c.bf16 %v83, %v83
    %v85 = vld [vmem:[#allocation4] sm:$0xff]
    %v86 = vld [vmem:[#allocation4 + $0x8] sm:$0xff]
    %v87 = vld [vmem:[#allocation4 + $0x10] sm:$0xff]
    %v88 = vld [vmem:[#allocation4 + $0x18] sm:$0xff]
    %v89 = vld [vmem:[#allocation4 + $0x20] sm:$0xff]
    %v90 = vld [vmem:[#allocation4 + $0x28] sm:$0xff]
    %v91 = vld [vmem:[#allocation4 + $0x30] sm:$0xff]
    %v92 = vld [vmem:[#allocation4 + $0x38] sm:$0xff]
    %v93 = vld [vmem:[#allocation6] sm:$0xf]
    %v95 = vperm.slane %v93, 0
    %v96 = vperm.slane %v93, 1
    %v97 = vperm.slane %v93, 2
    %v98 = vperm.slane %v93, 3
    %v111 = vunpack.c.l.b16 %v85
    %v112 = vunpack.c.h.b16 %v85
    %v113 = vunpack.c.l.b16 %v86
    %v114 = vunpack.c.h.b16 %v86
    %v115 = vunpack.c.l.b16 %v87
    %v116 = vunpack.c.h.b16 %v87
    %v117 = vunpack.c.l.b16 %v88
    %v118 = vunpack.c.h.b16 %v88
    %v119 = vunpack.c.l.b16 %v89
    %v120 = vunpack.c.h.b16 %v89
    %v121 = vunpack.c.l.b16 %v90
    %v122 = vunpack.c.h.b16 %v90
    %v123 = vunpack.c.l.b16 %v91
    %v124 = vunpack.c.h.b16 %v91
    %v125 = vunpack.c.l.b16 %v92
    %v126 = vunpack.c.h.b16 %v92
    %v127 = vpack.c.b16 %v115, %v111
    %v128 = vpack.c.b16 %v116, %v112
    %v129 = vpack.c.b16 %v117, %v113
    %v130 = vpack.c.b16 %v118, %v114
    %v131 = vpack.c.b16 %v123, %v119
    %v132 = vpack.c.b16 %v124, %v120
    %v133 = vpack.c.b16 %v125, %v121
    %v134 = vpack.c.b16 %v126, %v122
    %vm143 = vcmask 261120
    %v145 = vsel %vm143, %v84, 0
    %147 = vmatpush.bf16.msra.mxu0 0
    %148 = vmatpush.bf16.msra.mxu0 0
    %149 = vmatpush.bf16.msra.mxu0 0
    %150 = vmatpush.bf16.msra.mxu0 0
    %151 = vmatpush.bf16.msra.mxu0 0
    %152 = vmatpush.bf16.msra.mxu0 0
    %153 = vmatpush.bf16.msra.mxu0 %v131
    %154 = vmatpush.bf16.msra.mxu0 %v127
    %155 = vmatmul.bf16.gmra.mxu0 %v145
    %v156 = vpop.f32.mrf.mxu0
    %v157 = vadd.f32 %v95, %v156
    %v158 = vpop.f32.mrf.mxu0
    %159 = vdwg.mxu0
    %160 = vmatpush.bf16.msra.mxu0 0
    %161 = vmatpush.bf16.msra.mxu0 0
    %162 = vmatpush.bf16.msra.mxu0 0
    %163 = vmatpush.bf16.msra.mxu0 0
    %164 = vmatpush.bf16.msra.mxu0 0
    %165 = vmatpush.bf16.msra.mxu0 0
    %166 = vmatpush.bf16.msra.mxu0 %v132
    %167 = vmatpush.bf16.msra.mxu0 %v128
    %168 = vmatmul.bf16.gmra.mxu0 %v145
    %v169 = vpop.f32.mrf.mxu0
    %v170 = vadd.f32 %v96, %v169
    %v171 = vpop.f32.mrf.mxu0
    %172 = vdwg.mxu0
    %173 = vmatpush.bf16.msra.mxu0 0
    %174 = vmatpush.bf16.msra.mxu0 0
    %175 = vmatpush.bf16.msra.mxu0 0
    %176 = vmatpush.bf16.msra.mxu0 0
    %177 = vmatpush.bf16.msra.mxu0 0
    %178 = vmatpush.bf16.msra.mxu0 0
    %179 = vmatpush.bf16.msra.mxu0 %v133
    %180 = vmatpush.bf16.msra.mxu0 %v129
    %181 = vmatmul.bf16.gmra.mxu0 %v145
    %v182 = vpop.f32.mrf.mxu0
    %v183 = vadd.f32 %v97, %v182
    %v184 = vpop.f32.mrf.mxu0
    %185 = vdwg.mxu0
    %186 = vmatpush.bf16.msra.mxu0 0
    %187 = vmatpush.bf16.msra.mxu0 0
    %188 = vmatpush.bf16.msra.mxu0 0
    %189 = vmatpush.bf16.msra.mxu0 0
    %190 = vmatpush.bf16.msra.mxu0 0
    %191 = vmatpush.bf16.msra.mxu0 0
    %192 = vmatpush.bf16.msra.mxu0 %v134
    %193 = vmatpush.bf16.msra.mxu0 %v130
    %194 = vmatmul.bf16.gmra.mxu0 %v145
    %v195 = vpop.f32.mrf.mxu0
    %v196 = vadd.f32 %v98, %v195
    %v197 = vpop.f32.mrf.mxu0
    %198 = vdwg.mxu0
    %v199 = vmax.f32 %v157, 0.0
    %v200 = vmax.f32 %v170, 0.0
    %v201 = vmax.f32 %v183, 0.0
    %v202 = vmax.f32 %v196, 0.0
    %v203 = vpack.c.bf16 %v199, %v199
    %v204 = vpack.c.bf16 %v200, %v200
    %v205 = vpack.c.bf16 %v201, %v201
    %v206 = vpack.c.bf16 %v202, %v202
    %v207 = vld [vmem:[#allocation7] sm:$0xf]
    %v208 = vld [vmem:[#allocation7 + $0x4] sm:$0xf]
    %v209 = vld [vmem:[#allocation7 + $0x8] sm:$0xf]
    %v210 = vld [vmem:[#allocation7 + $0xc] sm:$0xf]
    %v211 = vld [vmem:[#allocation7 + $0x10] sm:$0xf]
    %v212 = vld [vmem:[#allocation7 + $0x14] sm:$0xf]
    %v213 = vld [vmem:[#allocation7 + $0x18] sm:$0xf]
    %v214 = vld [vmem:[#allocation7 + $0x1c] sm:$0xf]
    %v215 = vld [vmem:[#allocation7 + $0x20] sm:$0xf]
    %v216 = vld [vmem:[#allocation7 + $0x24] sm:$0xf]
    %v217 = vld [vmem:[#allocation7 + $0x28] sm:$0xf]
    %v218 = vld [vmem:[#allocation7 + $0x2c] sm:$0xf]
    %v219 = vld [vmem:[#allocation7 + $0x30] sm:$0xf]
    %v220 = vld [vmem:[#allocation7 + $0x34] sm:$0xf]
    %v221 = vld [vmem:[#allocation7 + $0x38] sm:$0xf]
    %v222 = vld [vmem:[#allocation7 + $0x3c] sm:$0xf]
    %v223 = vld [vmem:[#allocation7 + $0x40] sm:$0xf]
    %v224 = vld [vmem:[#allocation7 + $0x44] sm:$0xf]
    %v225 = vld [vmem:[#allocation7 + $0x48] sm:$0xf]
    %v226 = vld [vmem:[#allocation7 + $0x4c] sm:$0xf]
    %v227 = vld [vmem:[#allocation7 + $0x50] sm:$0xf]
    %v228 = vld [vmem:[#allocation7 + $0x54] sm:$0xf]
    %v229 = vld [vmem:[#allocation7 + $0x58] sm:$0xf]
    %v230 = vld [vmem:[#allocation7 + $0x5c] sm:$0xf]
    %v231 = vld [vmem:[#allocation7 + $0x60] sm:$0xf]
    %v232 = vld [vmem:[#allocation7 + $0x64] sm:$0xf]
    %v233 = vld [vmem:[#allocation7 + $0x68] sm:$0xf]
    %v234 = vld [vmem:[#allocation7 + $0x6c] sm:$0xf]
    %v235 = vld [vmem:[#allocation7 + $0x70] sm:$0xf]
    %v236 = vld [vmem:[#allocation7 + $0x74] sm:$0xf]
    %v237 = vld [vmem:[#allocation7 + $0x78] sm:$0xf]
    %v238 = vld [vmem:[#allocation7 + $0x7c] sm:$0xf]
    %v239 = vld [vmem:[#allocation7 + $0x80] sm:$0xf]
    %v240 = vld [vmem:[#allocation7 + $0x84] sm:$0xf]
    %v241 = vld [vmem:[#allocation7 + $0x88] sm:$0xf]
    %v242 = vld [vmem:[#allocation7 + $0x8c] sm:$0xf]
    %v243 = vld [vmem:[#allocation7 + $0x90] sm:$0xf]
    %v244 = vld [vmem:[#allocation7 + $0x94] sm:$0xf]
    %v245 = vld [vmem:[#allocation7 + $0x98] sm:$0xf]
    %v246 = vld [vmem:[#allocation7 + $0x9c] sm:$0xf]
    %v247 = vld [vmem:[#allocation7 + $0xa0] sm:$0xf]
    %v248 = vld [vmem:[#allocation7 + $0xa4] sm:$0xf]
    %v249 = vld [vmem:[#allocation7 + $0xa8] sm:$0xf]
    %v250 = vld [vmem:[#allocation7 + $0xac] sm:$0xf]
    %v251 = vld [vmem:[#allocation7 + $0xb0] sm:$0xf]
    %v252 = vld [vmem:[#allocation7 + $0xb4] sm:$0xf]
    %v253 = vld [vmem:[#allocation7 + $0xb8] sm:$0xf]
    %v254 = vld [vmem:[#allocation7 + $0xbc] sm:$0xf]
    %v255 = vld [vmem:[#allocation7 + $0xc0] sm:$0xf]
    %v256 = vld [vmem:[#allocation7 + $0xc4] sm:$0xf]
    %v257 = vld [vmem:[#allocation7 + $0xc8] sm:$0xf]
    %v258 = vld [vmem:[#allocation7 + $0xcc] sm:$0xf]
    %v259 = vld [vmem:[#allocation7 + $0xd0] sm:$0xf]
    %v260 = vld [vmem:[#allocation7 + $0xd4] sm:$0xf]
    %v261 = vld [vmem:[#allocation7 + $0xd8] sm:$0xf]
    %v262 = vld [vmem:[#allocation7 + $0xdc] sm:$0xf]
    %v263 = vld [vmem:[#allocation7 + $0xe0] sm:$0xf]
    %v264 = vld [vmem:[#allocation7 + $0xe4] sm:$0xf]
    %v265 = vld [vmem:[#allocation7 + $0xe8] sm:$0xf]
    %v266 = vld [vmem:[#allocation7 + $0xec] sm:$0xf]
    %v267 = vld [vmem:[#allocation7 + $0xf0] sm:$0xf]
    %v268 = vld [vmem:[#allocation7 + $0xf4] sm:$0xf]
    %v269 = vld [vmem:[#allocation7 + $0xf8] sm:$0xf]
    %v270 = vld [vmem:[#allocation7 + $0xfc] sm:$0xf]
    %v271 = vld [vmem:[%s4] sm:$0x1]
    %v273 = vperm.slane %v271, 0
    %v339 = vunpack.c.l.b16 %v207
    %v340 = vunpack.c.l.b16 %v208
    %v341 = vunpack.c.l.b16 %v209
    %v342 = vunpack.c.l.b16 %v210
    %v343 = vunpack.c.l.b16 %v211
    %v344 = vunpack.c.l.b16 %v212
    %v345 = vunpack.c.l.b16 %v213
    %v346 = vunpack.c.l.b16 %v214
    %v347 = vunpack.c.l.b16 %v215
    %v348 = vunpack.c.l.b16 %v216
    %v349 = vunpack.c.l.b16 %v217
    %v350 = vunpack.c.l.b16 %v218
    %v351 = vunpack.c.l.b16 %v219
    %v352 = vunpack.c.l.b16 %v220
    %v353 = vunpack.c.l.b16 %v221
    %v354 = vunpack.c.l.b16 %v222
    %v355 = vunpack.c.l.b16 %v223
    %v356 = vunpack.c.l.b16 %v224
    %v357 = vunpack.c.l.b16 %v225
    %v358 = vunpack.c.l.b16 %v226
    %v359 = vunpack.c.l.b16 %v227
    %v360 = vunpack.c.l.b16 %v228
    %v361 = vunpack.c.l.b16 %v229
    %v362 = vunpack.c.l.b16 %v230
    %v363 = vunpack.c.l.b16 %v231
    %v364 = vunpack.c.l.b16 %v232
    %v365 = vunpack.c.l.b16 %v233
    %v366 = vunpack.c.l.b16 %v234
    %v367 = vunpack.c.l.b16 %v235
    %v368 = vunpack.c.l.b16 %v236
    %v369 = vunpack.c.l.b16 %v237
    %v370 = vunpack.c.l.b16 %v238
    %v371 = vunpack.c.l.b16 %v239
    %v372 = vunpack.c.l.b16 %v240
    %v373 = vunpack.c.l.b16 %v241
    %v374 = vunpack.c.l.b16 %v242
    %v375 = vunpack.c.l.b16 %v243
    %v376 = vunpack.c.l.b16 %v244
    %v377 = vunpack.c.l.b16 %v245
    %v378 = vunpack.c.l.b16 %v246
    %v379 = vunpack.c.l.b16 %v247
    %v380 = vunpack.c.l.b16 %v248
    %v381 = vunpack.c.l.b16 %v249
    %v382 = vunpack.c.l.b16 %v250
    %v383 = vunpack.c.l.b16 %v251
    %v384 = vunpack.c.l.b16 %v252
    %v385 = vunpack.c.l.b16 %v253
    %v386 = vunpack.c.l.b16 %v254
    %v387 = vunpack.c.l.b16 %v255
    %v388 = vunpack.c.l.b16 %v256
    %v389 = vunpack.c.l.b16 %v257
    %v390 = vunpack.c.l.b16 %v258
    %v391 = vunpack.c.l.b16 %v259
    %v392 = vunpack.c.l.b16 %v260
    %v393 = vunpack.c.l.b16 %v261
    %v394 = vunpack.c.l.b16 %v262
    %v395 = vunpack.c.l.b16 %v263
    %v396 = vunpack.c.l.b16 %v264
    %v397 = vunpack.c.l.b16 %v265
    %v398 = vunpack.c.l.b16 %v266
    %v399 = vunpack.c.l.b16 %v267
    %v400 = vunpack.c.l.b16 %v268
    %v401 = vunpack.c.l.b16 %v269
    %v402 = vunpack.c.l.b16 %v270
    %v403 = vpack.c.b16 %v340, %v339
    %v404 = vpack.c.b16 %v342, %v341
    %v405 = vpack.c.b16 %v344, %v343
    %v406 = vpack.c.b16 %v346, %v345
    %v407 = vpack.c.b16 %v348, %v347
    %v408 = vpack.c.b16 %v350, %v349
    %v409 = vpack.c.b16 %v352, %v351
    %v410 = vpack.c.b16 %v354, %v353
    %v411 = vpack.c.b16 %v356, %v355
    %v412 = vpack.c.b16 %v358, %v357
    %v413 = vpack.c.b16 %v360, %v359
    %v414 = vpack.c.b16 %v362, %v361
    %v415 = vpack.c.b16 %v364, %v363
    %v416 = vpack.c.b16 %v366, %v365
    %v417 = vpack.c.b16 %v368, %v367
    %v418 = vpack.c.b16 %v370, %v369
    %v419 = vpack.c.b16 %v372, %v371
    %v420 = vpack.c.b16 %v374, %v373
    %v421 = vpack.c.b16 %v376, %v375
    %v422 = vpack.c.b16 %v378, %v377
    %v423 = vpack.c.b16 %v380, %v379
    %v424 = vpack.c.b16 %v382, %v381
    %v425 = vpack.c.b16 %v384, %v383
    %v426 = vpack.c.b16 %v386, %v385
    %v427 = vpack.c.b16 %v388, %v387
    %v428 = vpack.c.b16 %v390, %v389
    %v429 = vpack.c.b16 %v392, %v391
    %v430 = vpack.c.b16 %v394, %v393
    %v431 = vpack.c.b16 %v396, %v395
    %v432 = vpack.c.b16 %v398, %v397
    %v433 = vpack.c.b16 %v400, %v399
    %v434 = vpack.c.b16 %v402, %v401
    %467 = vmatpush.bf16.msra.mxu0 %v410
    %468 = vmatpush.bf16.msra.mxu0 %v409
    %469 = vmatpush.bf16.msra.mxu0 %v408
    %470 = vmatpush.bf16.msra.mxu0 %v407
    %471 = vmatpush.bf16.msra.mxu0 %v406
    %472 = vmatpush.bf16.msra.mxu0 %v405
    %473 = vmatpush.bf16.msra.mxu0 %v404
    %474 = vmatpush.bf16.msra.mxu0 %v403
    %475 = vmatmul.bf16.gmra.mxu0 %v203
    %v476 = vpop.f32.mrf.mxu0
    %v477 = vadd.f32 %v273, %v476
    %v478 = vpop.f32.mrf.mxu0
    %479 = vdwg.mxu0
    %480 = vmatpush.bf16.msra.mxu0 %v418
    %481 = vmatpush.bf16.msra.mxu0 %v417
    %482 = vmatpush.bf16.msra.mxu0 %v416
    %483 = vmatpush.bf16.msra.mxu0 %v415
    %484 = vmatpush.bf16.msra.mxu0 %v414
    %485 = vmatpush.bf16.msra.mxu0 %v413
    %486 = vmatpush.bf16.msra.mxu0 %v412
    %487 = vmatpush.bf16.msra.mxu0 %v411
    %488 = vmatmul.bf16.gmra.mxu0 %v204
    %v489 = vpop.f32.mrf.mxu0
    %v490 = vadd.f32 %v477, %v489
    %v491 = vpop.f32.mrf.mxu0
    %492 = vdwg.mxu0
    %493 = vmatpush.bf16.msra.mxu0 %v426
    %494 = vmatpush.bf16.msra.mxu0 %v425
    %495 = vmatpush.bf16.msra.mxu0 %v424
    %496 = vmatpush.bf16.msra.mxu0 %v423
    %497 = vmatpush.bf16.msra.mxu0 %v422
    %498 = vmatpush.bf16.msra.mxu0 %v421
    %499 = vmatpush.bf16.msra.mxu0 %v420
    %500 = vmatpush.bf16.msra.mxu0 %v419
    %501 = vmatmul.bf16.gmra.mxu0 %v205
    %v502 = vpop.f32.mrf.mxu0
    %v503 = vadd.f32 %v490, %v502
    %v504 = vpop.f32.mrf.mxu0
    %505 = vdwg.mxu0
    %506 = vmatpush.bf16.msra.mxu0 %v434
    %507 = vmatpush.bf16.msra.mxu0 %v433
    %508 = vmatpush.bf16.msra.mxu0 %v432
    %509 = vmatpush.bf16.msra.mxu0 %v431
    %510 = vmatpush.bf16.msra.mxu0 %v430
    %511 = vmatpush.bf16.msra.mxu0 %v429
    %512 = vmatpush.bf16.msra.mxu0 %v428
    %513 = vmatpush.bf16.msra.mxu0 %v427
    %514 = vmatmul.bf16.gmra.mxu0 %v206
    %v515 = vpop.f32.mrf.mxu0
    %v516 = vadd.f32 %v503, %v515
    %v517 = vpop.f32.mrf.mxu0
    %518 = vdwg.mxu0
    %v519 = vpack.c.bf16 %v516, %v516
    %520 = vst [vmem:[%s5] sm:$0xf] %v519
    // Predicated region
    $region38: #{dqn_forward.1} parent=1 // pred_check
      _
    $region39: #{dqn_forward.1} parent=1 // pred_check_branch
      %522 = sbr.rel (0) target = $region41
    $region40: #{dqn_forward.1} parent=1 // pred_region
      _
    $region41: #{dqn_forward.1} parent=1 // pred_fallthru
      _
    // Predicated region
    $region42: #{dqn_forward.1} parent=1 // pred_check
      _
    $region43: #{dqn_forward.1} parent=1 // pred_check_branch
      %524 = sbr.rel (0) target = $region45
    $region44: #{dqn_forward.1} parent=1 // pred_region
      _
    $region45: #{dqn_forward.1} parent=1 // pred_fallthru
      _
    %525 = vsyncpa [#allocation3], 1
    %526 = vsyncpa [#allocation5], 1
    %527 = vsyncpa [#allocation8], 1

</llo_original>
